<compile_context>
chip_gen: v7x
topology: tpu7x:2x2x1
jax: 0.10.0
libtpu: 0.0.40
codegen_flags: <defaults>
</compile_context>

<pallas_src>
import math

import jax
import jax.numpy as jnp
from jax.experimental import pallas as pl
from jax.experimental.pallas import tpu as pltpu


def _round_up(n, m):
    return ((n + m - 1) // m) * m


def _aves_kernel(x_ref, wf_ref, wc_ref, b_ref, mean_ref, logits_ref, acc_ref):
    # x_ref:      (B_BLK, T_CHUNK)  bf16 streamed signal tile (lane-dense)
    # wf_ref:     (T_CHUNK, D_pad)  f32 fold+feature weights: row t = W_feat[t % hop]/F
    # wc_ref:     (D_pad,  C_pad)   f32 classifier head weights, transposed + padded
    # b_ref:      (1,      C_pad)   f32 classifier head bias (padded)
    # mean_ref:   (B_BLK,  D_pad)   mean-embedding output block
    # logits_ref: (B_BLK,  C_pad)   logits output block
    # acc_ref:    (B_BLK, T_CHUNK)  f32 running sum over time chunks (scratch)
    t = pl.program_id(1)

    @pl.when(t == 0)
    def _():
        acc_ref[...] = jnp.zeros_like(acc_ref)

    # Lane-dense VPU accumulation of the streamed chunk (f32 accumulator).
    acc_ref[...] += x_ref[...].astype(jnp.float32)

    @pl.when(t == pl.num_programs(1) - 1)
    def _():
        # Frame fold + linear feature extraction + 1/F mean in one MXU matmul:
        # acc[b, tc] holds sum_c sig[b, c*T_CHUNK + tc]; wf row tc is
        # W_feat[tc % hop, :] / F, so acc @ wf == mean embedding (linear stand-in).
        mean_emb = jnp.dot(acc_ref[...], wf_ref[...],
                           preferred_element_type=jnp.float32)
        logits = jnp.dot(mean_emb, wc_ref[...],
                         preferred_element_type=jnp.float32) + b_ref[...]
        mean_ref[...] = mean_emb.astype(mean_ref.dtype)
        logits_ref[...] = logits.astype(logits_ref.dtype)


def aves_classifier_forward(sig, w_feat, w_cls, b_cls, *, hop,
                            frames_dtype=jnp.bfloat16,
                            time_chunk_target=512,
                            max_batch_block=128):
    """Forward pass of AvesClassifier (linear feature-extractor stand-in).

    sig:    (B, T)   float32 waveform batch.
    w_feat: (hop, D) linear feature-extractor stand-in weights.
    w_cls:  (C, D)   classifier head weight (PyTorch nn.Linear layout).
    b_cls:  (C,)     classifier head bias.
    Returns (mean_embedding (B, D) f32, logits (B, C) f32).
    """
    B, T = sig.shape
    assert T % hop == 0, "signal length must be a whole number of frames"
    F_ = T // hop
    D = w_feat.shape[1]
    C = w_cls.shape[0]

    # ---- tile-size selection (per-TensorCore VMEM budget) -------------------
    B_BLK = min(_round_up(B, 8), max_batch_block)        # MXU M rows, sublane-full
    B_pad = _round_up(B, B_BLK)
    t_base = math.lcm(128, hop)                          # lane-dense & frame-aligned
    T_CHUNK = min(_round_up(T, t_base), _round_up(time_chunk_target, t_base))
    T_pad = _round_up(T, T_CHUNK)
    D_pad = _round_up(D, 128)
    C_pad = _round_up(C, 128)
    n_b = B_pad // B_BLK
    n_t = T_pad // T_CHUNK

    # ---- layout glue (zero padding + weight pre-fold) ------------------------
    # Streamed signal keeps its natural lane-dense (B, T) layout; bf16 halves the
    # HBM stream.  Accumulation in the kernel stays f32.
    x_p = jnp.zeros((B_pad, T_pad), frames_dtype).at[:B, :T].set(
        sig.astype(frames_dtype))

    # Fold + feature + mean matrix: row t = W_feat[t % hop, :] / F.  Zero-padded
    # time/batch contribute nothing; padded D/C lanes stay exactly zero.
    wf_fold = jnp.tile(w_feat.astype(jnp.float32), (T_CHUNK // hop, 1)) / F_
    wf_p = jnp.zeros((T_CHUNK, D_pad), jnp.float32).at[:, :D].set(wf_fold)
    wc_p = jnp.zeros((D_pad, C_pad), jnp.float32).at[:D, :C].set(
        w_cls.astype(jnp.float32).T)
    b_p = jnp.zeros((1, C_pad), jnp.float32).at[0, :C].set(
        b_cls.astype(jnp.float32))

    # ---- cost estimate + explicit VMEM budget -------------------------------
    itemsize = jnp.dtype(frames_dtype).itemsize
    bytes_accessed = (B_pad * T_pad * itemsize
                      + (wf_p.size + wc_p.size + b_p.size) * 4
                      + B_pad * (D_pad + C_pad) * 4)
    flops = (2 * B_pad * T_pad                         # chunk accumulation
             + 2 * B_pad * T_CHUNK * D_pad             # fold + feature matmul
             + 2 * B_pad * D_pad * C_pad)              # classifier head
    cost = pl.CostEstimate(flops=int(flops), transcendentals=0,
                           bytes_accessed=int(bytes_accessed))

    working = (2 * B_BLK * T_CHUNK * itemsize          # x tile, double-buffered
               + 2 * (wf_p.size + wc_p.size + b_p.size) * 4   # invariant operands
               + B_BLK * T_CHUNK * 4                   # f32 accumulator scratch
               + 2 * B_BLK * (D_pad + C_pad) * 4)      # output blocks
    vmem_limit = int(min(64 << 20, max(3 * working + (1 << 20), 16 << 20)))

    # Batch axis shards across TensorCores only when it has real work; the time
    # axis is a carried reduction and must stay "arbitrary".
    dim_sems = ("parallel" if n_b > 1 else "arbitrary", "arbitrary")

    mean_out, logits_out = pl.pallas_call(
        _aves_kernel,
        out_shape=(jax.ShapeDtypeStruct((B_pad, D_pad), jnp.float32),
                   jax.ShapeDtypeStruct((B_pad, C_pad), jnp.float32)),
        grid_spec=pltpu.PrefetchScalarGridSpec(
            num_scalar_prefetch=0,
            grid=(n_b, n_t),
            in_specs=[
                pl.BlockSpec((B_BLK, T_CHUNK), lambda i, t: (i, t)),   # signal tile
                pl.BlockSpec((T_CHUNK, D_pad), lambda i, t: (0, 0)),   # fold+feat W
                pl.BlockSpec((D_pad, C_pad), lambda i, t: (0, 0)),     # head W^T
                pl.BlockSpec((1, C_pad), lambda i, t: (0, 0)),         # head bias
            ],
            out_specs=[
                pl.BlockSpec((B_BLK, D_pad), lambda i, t: (i, 0)),
                pl.BlockSpec((B_BLK, C_pad), lambda i, t: (i, 0)),
            ],
            scratch_shapes=[pltpu.VMEM((B_BLK, T_CHUNK), jnp.float32)],
        ),
        compiler_params=pltpu.CompilerParams(
            dimension_semantics=dim_sems,
            vmem_limit_bytes=vmem_limit),
        cost_estimate=cost,
    )(x_p, wf_p, wc_p, b_p)

    # Strip batch / lane padding.
    return mean_out[:B, :D], logits_out[:B, :C]


if __name__ == "__main__":
    # Small shapes consistent with the module's forward:
    #   batch=2, time=256 (=> 8 frames of hop 32), embedding_dim=32, n_classes=4
    B, T, HOP, D, C = 2, 256, 32, 32, 4

    key = jax.random.PRNGKey(0)
    k_sig, k_wf, k_wc, k_bc = jax.random.split(key, 4)

    sig = jax.random.normal(k_sig, (B, T), dtype=jnp.float32)
    # Deterministic synthetic parameters (shapes follow the module's __init__):
    w_feat = jax.random.normal(k_wf, (HOP, D), dtype=jnp.float32) * 0.05  # extractor stand-in
    w_cls = jax.random.normal(k_wc, (C, D), dtype=jnp.float32) * 0.05     # nn.Linear(D, C).weight
    b_cls = jax.random.normal(k_bc, (C,), dtype=jnp.float32) * 0.05       # nn.Linear(D, C).bias

    mean_emb, logits = aves_classifier_forward(sig, w_feat, w_cls, b_cls, hop=HOP)
    mean_emb = jax.block_until_ready(mean_emb)
    logits = jax.block_until_ready(logits)

    # Pure-JAX reference using the same bf16 input quantization the kernel streams
    # (weights and accumulation stay f32 in both): frame -> feature -> mean -> head.
    x_q = sig.astype(jnp.bfloat16).astype(jnp.float32)
    feat_ref = jnp.einsum("bfh,hd->bfd", x_q.reshape(B, T // HOP, HOP), w_feat)
    mean_ref = feat_ref.mean(axis=1)
    logits_ref = mean_ref @ w_cls.T + b_cls

    assert mean_emb.shape == (B, D) and logits.shape == (B, C)
    assert jnp.allclose(mean_emb, mean_ref, atol=1e-3, rtol=1e-3)
    assert jnp.allclose(logits, logits_ref, atol=1e-3, rtol=1e-3)

    print("KERNEL_OK")
</pallas_src>

<mosaic_0001>
module attributes {stable_mosaic.version = 11 : i64} {
  func.func @_aves_kernel(%arg0: i32, %arg1: i32, %arg2: memref<8x256xbf16, #tpu.memory_space<vmem>>, %arg3: memref<256x128xf32, #tpu.memory_space<vmem>>, %arg4: memref<128x128xf32, #tpu.memory_space<vmem>>, %arg5: memref<1x128xf32, #tpu.memory_space<vmem>>, %arg6: memref<8x128xf32, #tpu.memory_space<vmem>>, %arg7: memref<8x128xf32, #tpu.memory_space<vmem>>, %arg8: memref<8x256xf32, #tpu.memory_space<vmem>>) attributes {dimension_semantics = [#tpu.dimension_semantics<arbitrary>, #tpu.dimension_semantics<arbitrary>], iteration_bounds = array<i64: 1, 1>, scalar_prefetch = 0 : i64, scratch_operands = 1 : i64, tpu.core_type = #tpu.core_type<tc>, window_params = [{transform_indices = @transform_0, window_bounds = array<i64: 8, 256>}, {pipeline_mode = #tpu.pipeline_mode<synchronous>, transform_indices = @transform_1, window_bounds = array<i64: 256, 128>}, {pipeline_mode = #tpu.pipeline_mode<synchronous>, transform_indices = @transform_2, window_bounds = array<i64: 128, 128>}, {pipeline_mode = #tpu.pipeline_mode<synchronous>, transform_indices = @transform_3, window_bounds = array<i64: 1, 128>}, {transform_indices = @transform_4, window_bounds = array<i64: 8, 128>}, {transform_indices = @transform_5, window_bounds = array<i64: 8, 128>}]} {
    %c0_i32 = arith.constant 0 : i32
    %0 = arith.cmpi eq, %arg1, %c0_i32 : i32
    %1 = arith.extui %0 : i1 to i32
    %c0_i32_0 = arith.constant 0 : i32
    %2 = arith.cmpi ne, %1, %c0_i32_0 : i32
    scf.if %2 {
      %cst = arith.constant 0.000000e+00 : f32
      %11 = vector.broadcast %cst : f32 to vector<8x256xf32>
      %c0_8 = arith.constant 0 : index
      %c0_9 = arith.constant 0 : index
      %12 = vector.load %arg8[%c0_8, %c0_9] : memref<8x256xf32, #tpu.memory_space<vmem>>, vector<8x256xf32>
      tpu.vector_store %arg8[%c0_8, %c0_9], %11 {strides = array<i32>} : memref<8x256xf32, #tpu.memory_space<vmem>>, vector<8x256xf32>,
    } else {
    }
    %c0 = arith.constant 0 : index
    %c0_1 = arith.constant 0 : index
    %3 = vector.load %arg8[%c0, %c0_1] : memref<8x256xf32, #tpu.memory_space<vmem>>, vector<8x256xf32>
    %c0_2 = arith.constant 0 : index
    %c0_3 = arith.constant 0 : index
    %4 = vector.load %arg2[%c0_2, %c0_3] : memref<8x256xbf16, #tpu.memory_space<vmem>>, vector<8x256xbf16>
    %5 = arith.extf %4 : vector<8x256xbf16> to vector<8x256xf32>
    %6 = arith.addf %3, %5 : vector<8x256xf32>
    %c0_4 = arith.constant 0 : index
    %c0_5 = arith.constant 0 : index
    %7 = vector.load %arg8[%c0_4, %c0_5] : memref<8x256xf32, #tpu.memory_space<vmem>>, vector<8x256xf32>
    tpu.vector_store %arg8[%c0_4, %c0_5], %6 {strides = array<i32>} : memref<8x256xf32, #tpu.memory_space<vmem>>, vector<8x256xf32>,
    %c0_i32_6 = arith.constant 0 : i32
    %8 = arith.cmpi eq, %arg1, %c0_i32_6 : i32
    %9 = arith.extui %8 : i1 to i32
    %c0_i32_7 = arith.constant 0 : i32
    %10 = arith.cmpi ne, %9, %c0_i32_7 : i32
    scf.if %10 {
      %c0_8 = arith.constant 0 : index
      %c0_9 = arith.constant 0 : index
      %11 = vector.load %arg8[%c0_8, %c0_9] : memref<8x256xf32, #tpu.memory_space<vmem>>, vector<8x256xf32>
      %c0_10 = arith.constant 0 : index
      %c0_11 = arith.constant 0 : index
      %12 = vector.load %arg3[%c0_10, %c0_11] : memref<256x128xf32, #tpu.memory_space<vmem>>, vector<256x128xf32>
      %cst = arith.constant dense<0.000000e+00> : vector<8x128xf32>
      %13 = tpu.matmul %11, %12, %cst {dimension_numbers = #tpu.dot_dimension_numbers<[1], [0], [0], [1], [0, 0, 1, 1], [], []>} : vector<8x256xf32>, vector<256x128xf32>, vector<8x128xf32> -> vector<8x128xf32>
      %c0_12 = arith.constant 0 : index
      %c0_13 = arith.constant 0 : index
      %14 = vector.load %arg4[%c0_12, %c0_13] : memref<128x128xf32, #tpu.memory_space<vmem>>, vector<128x128xf32>
      %cst_14 = arith.constant dense<0.000000e+00> : vector<8x128xf32>
      %15 = tpu.matmul %13, %14, %cst_14 {dimension_numbers = #tpu.dot_dimension_numbers<[1], [0], [0], [1], [0, 0, 1, 1], [], []>} : vector<8x128xf32>, vector<128x128xf32>, vector<8x128xf32> -> vector<8x128xf32>
      %c0_15 = arith.constant 0 : index
      %c0_16 = arith.constant 0 : index
      %16 = vector.load %arg5[%c0_15, %c0_16] : memref<1x128xf32, #tpu.memory_space<vmem>>, vector<1x128xf32>
      %17 = vector.broadcast %16 : vector<1x128xf32> to vector<8x128xf32>
      %18 = arith.addf %15, %17 : vector<8x128xf32>
      %c0_17 = arith.constant 0 : index
      %c0_18 = arith.constant 0 : index
      %19 = vector.load %arg6[%c0_17, %c0_18] : memref<8x128xf32, #tpu.memory_space<vmem>>, vector<8x128xf32>
      tpu.vector_store %arg6[%c0_17, %c0_18], %13 {strides = array<i32>} : memref<8x128xf32, #tpu.memory_space<vmem>>, vector<8x128xf32>,
      %c0_19 = arith.constant 0 : index
      %c0_20 = arith.constant 0 : index
      %20 = vector.load %arg7[%c0_19, %c0_20] : memref<8x128xf32, #tpu.memory_space<vmem>>, vector<8x128xf32>
      tpu.vector_store %arg7[%c0_19, %c0_20], %18 {strides = array<i32>} : memref<8x128xf32, #tpu.memory_space<vmem>>, vector<8x128xf32>,
    } else {
    }
    return
  }
  func.func @transform_0(%arg0: i32, %arg1: i32) -> (i32, i32) {
    %c0_i32 = arith.constant 0 : i32
    return %arg0, %arg1 : i32, i32
  }
  func.func @transform_1(%arg0: i32, %arg1: i32) -> (i32, i32) {
    %c0_i32 = arith.constant 0 : i32
    %c0_i32_0 = arith.constant 0 : i32
    %c0_i32_1 = arith.constant 0 : i32
    return %c0_i32, %c0_i32_0 : i32, i32
  }
  func.func @transform_2(%arg0: i32, %arg1: i32) -> (i32, i32) {
    %c0_i32 = arith.constant 0 : i32
    %c0_i32_0 = arith.constant 0 : i32
    %c0_i32_1 = arith.constant 0 : i32
    return %c0_i32, %c0_i32_0 : i32, i32
  }
  func.func @transform_3(%arg0: i32, %arg1: i32) -> (i32, i32) {
    %c0_i32 = arith.constant 0 : i32
    %c0_i32_0 = arith.constant 0 : i32
    %c0_i32_1 = arith.constant 0 : i32
    return %c0_i32, %c0_i32_0 : i32, i32
  }
  func.func @transform_4(%arg0: i32, %arg1: i32) -> (i32, i32) {
    %c0_i32 = arith.constant 0 : i32
    %c0_i32_0 = arith.constant 0 : i32
    return %arg0, %c0_i32 : i32, i32
  }
  func.func @transform_5(%arg0: i32, %arg1: i32) -> (i32, i32) {
    %c0_i32 = arith.constant 0 : i32
    %c0_i32_0 = arith.constant 0 : i32
    return %arg0, %c0_i32 : i32, i32
  }
}

</mosaic_0001>

<llo_original>
// kernel: tpu_custom_call.1
$region0: #{tpu_custom_call.1}
  #allocation0 [shape = 'u32[]', space=smem, size = 0x4, offset = 0x4, fixed_abs, tag = 'smem constant byte address 0x4 - core index']
  #allocation1 [shape = 'u32[144,128]{1,0:T(1,128)}', space=vmem, size = 0x12000, scoped, tag = 'internal scratch']
  #allocation2 [shape = 'f32[8,256]{1,0:T(8,128)}', space=vmem, size = 0x2000, scoped, tag = 'scratch operand']
  %s0 = inlined_call_operand.hbm [shape: bf16[8,256], index: 0, kind: input, shape index: {}]
  %s1 = inlined_call_operand.hbm [shape: f32[256,128], index: 1, kind: input, shape index: {}]
  %s2 = inlined_call_operand.hbm [shape: f32[128,128], index: 2, kind: input, shape index: {}]
  %s3 = inlined_call_operand.vmem [shape: f32[1,128], index: 3, kind: input, shape index: {}]
  %s4 = inlined_call_operand.hbm [shape: f32[8,128], index: 4, kind: output, shape index: {0}]
  %s5 = inlined_call_operand.hbm [shape: f32[8,128], index: 5, kind: output, shape index: {1}]
  %6 = xla_tuple %s4, %s5
  %s7 = sld [smem:[#allocation0]]
  $region54: #{tpu_custom_call.1} parent=0
    _
  %s9 = ssub.s32 1, %s7
  %s10 = scalar_select 0, %s9, %s7
  $region1: #{tpu_custom_call.1} parent=0
    #allocation3 [shape = 'u8[4096]{0}', space=vmem, size = 0x1000, scoped, tag = 'input window, operand 0, single buffered']
    #allocation4 [shape = 's32[1]{0}', space=sflag, size = 0x4, scoped, tag = 'scoped memory for tpu_custom_call.1']
    #allocation5 [shape = 's32[1]{0}', space=sflag, size = 0x4, scoped, tag = 'scoped memory for tpu_custom_call.1']
    #allocation6 [shape = 'u8[131072]{0}', space=vmem, size = 0x20000, scoped, tag = 'input window, operand 1, single buffered']
    #allocation7 [shape = 's32[1]{0}', space=sflag, size = 0x4, scoped, tag = 'scoped memory for tpu_custom_call.1']
    #allocation8 [shape = 'u8[65536]{0}', space=vmem, size = 0x10000, scoped, tag = 'input window, operand 2, single buffered']
    #allocation9 [shape = 'u8[4096]{0}', space=vmem, size = 0x1000, scoped, tag = 'output window, operand 0, single buffered']
    #allocation10 [shape = 'u8[4096]{0}', space=vmem, size = 0x1000, scoped, tag = 'output window, operand 1, single buffered']
    #allocation11 [shape = 's32[1]{0}', space=sflag, size = 0x4, scoped, tag = 'scoped memory for tpu_custom_call.1']
    %11 = vsyncpa [#allocation4], 0
    %12 = vsyncpa [#allocation7], 0
    %13 = vsyncpa [#allocation5], 0
    %14 = vsyncpa [#allocation11], 0
    // Predicated region
    $region2: #{tpu_custom_call.1} parent=1 // pred_check
      _
    $region3: #{tpu_custom_call.1} parent=1 // pred_check_branch
      %16 = sbr.rel (0) target = $region5
    $region4: #{tpu_custom_call.1} parent=1 // pred_region
      %s18 = ssub.s32 128, 128
      %19 = vsyncadd [#allocation4], %s18
      %s21 = sshll.u32 [#allocation3], 4
      %s22 = int_to_ptr.vmem [resolvable:$true] %s21
      %24 = dma.hbm_to_vmem [thread:$0]  %s0, 128, %s22, [#allocation4]
    $region5: #{tpu_custom_call.1} parent=1 // pred_fallthru
      _
    // Predicated region
    $region6: #{tpu_custom_call.1} parent=1 // pred_check
      _
    $region7: #{tpu_custom_call.1} parent=1 // pred_check_branch
      %26 = sbr.rel (0) target = $region9
    $region8: #{tpu_custom_call.1} parent=1 // pred_region
      %s28 = ssub.s32 4096, 4096
      %29 = vsyncadd [#allocation7], %s28
      %s30 = sshll.u32 [#allocation6], 4
      %s31 = int_to_ptr.vmem [resolvable:$true] %s30
      %36 = dma.hbm_to_vmem [thread:$0]  %s1, 4096, %s31, [#allocation7], 128, 128, 8
    $region9: #{tpu_custom_call.1} parent=1 // pred_fallthru
      _
    // Predicated region
    $region10: #{tpu_custom_call.1} parent=1 // pred_check
      _
    $region11: #{tpu_custom_call.1} parent=1 // pred_check_branch
      %38 = sbr.rel (0) target = $region13
    $region12: #{tpu_custom_call.1} parent=1 // pred_region
      %s40 = ssub.s32 2048, 2048
      %41 = vsyncadd [#allocation7], %s40
      %s42 = sshll.u32 [#allocation8], 4
      %s43 = int_to_ptr.vmem [resolvable:$true] %s42
      %48 = dma.hbm_to_vmem [thread:$0]  %s2, 2048, %s43, [#allocation7], 128, 128, 8
    $region13: #{tpu_custom_call.1} parent=1 // pred_fallthru
      _
    // Predicated region
    $region14: #{tpu_custom_call.1} parent=1 // pred_check
      _
    $region15: #{tpu_custom_call.1} parent=1 // pred_check_branch
      %50 = sbr.rel (0) target = $region17
    $region16: #{tpu_custom_call.1} parent=1 // pred_region
      _
    $region17: #{tpu_custom_call.1} parent=1 // pred_fallthru
      _
    // Predicated region
    $region18: #{tpu_custom_call.1} parent=1 // pred_check
      _
    $region19: #{tpu_custom_call.1} parent=1 // pred_check_branch
      %52 = sbr.rel (0) target = $region21
    $region20: #{tpu_custom_call.1} parent=1 // pred_region
      %53 = dma.done [#allocation4], 128
    $region21: #{tpu_custom_call.1} parent=1 // pred_fallthru
      _
    // Predicated region
    $region22: #{tpu_custom_call.1} parent=1 // pred_check
      _
    $region23: #{tpu_custom_call.1} parent=1 // pred_check_branch
      %55 = sbr.rel (0) target = $region25
    $region24: #{tpu_custom_call.1} parent=1 // pred_region
      %56 = dma.done [#allocation7], 4096
    $region25: #{tpu_custom_call.1} parent=1 // pred_fallthru
      _
    // Predicated region
    $region26: #{tpu_custom_call.1} parent=1 // pred_check
      _
    $region27: #{tpu_custom_call.1} parent=1 // pred_check_branch
      %58 = sbr.rel (0) target = $region29
    $region28: #{tpu_custom_call.1} parent=1 // pred_region
      %59 = dma.done [#allocation7], 2048
    $region29: #{tpu_custom_call.1} parent=1 // pred_fallthru
      _
    %p60 = scmp.eq.s32.totalorder 0, 0
    // Predicated region
    $region30: #{tpu_custom_call.1} parent=1 // pred_check
      %p61 = pneg %p60
    $region31: #{tpu_custom_call.1} parent=1 // pred_check_branch
      %63 = sbr.rel (%p61) target = $region33
    $region32: #{tpu_custom_call.1} parent=1 // pred_region
      %64 = vst [vmem:[#allocation2] sm:$0xff] 0.0
      %65 = vst [vmem:[#allocation2 + $0x8] sm:$0xff] 0.0
    $region33: #{tpu_custom_call.1} parent=1 // pred_fallthru
      _
    %v66 = vld [vmem:[#allocation2] sm:$0xff]
    %v67 = vld [vmem:[#allocation2 + $0x8] sm:$0xff]
    %v68 = vld [vmem:[#allocation3] sm:$0xff]
    %v69 = vunpack.c.l.bf16 %v68
    %v70 = vunpack.c.h.bf16 %v68
    %v71 = vadd.f32 %v66, %v69
    %v72 = vadd.f32 %v67, %v70
    %73 = vst [vmem:[#allocation2] sm:$0xff] %v71
    %74 = vst [vmem:[#allocation2 + $0x8] sm:$0xff] %v72
    // Predicated region
    $region34: #{tpu_custom_call.1} parent=1 // pred_check
      %p75 = pneg %p60
    $region35: #{tpu_custom_call.1} parent=1 // pred_check_branch
      %77 = sbr.rel (%p75) target = $region37
    $region36: #{tpu_custom_call.1} parent=1 // pred_region
      %v78 = vld [vmem:[#allocation2] sm:$0xff]
      %v79 = vld [vmem:[#allocation2 + $0x8] sm:$0xff]
      %v80 = vld [vmem:[#allocation6] sm:$0xff]
      %v81 = vld [vmem:[#allocation6 + $0x8] sm:$0xff]
      %v82 = vld [vmem:[#allocation6 + $0x10] sm:$0xff]
      %v83 = vld [vmem:[#allocation6 + $0x18] sm:$0xff]
      %v84 = vld [vmem:[#allocation6 + $0x20] sm:$0xff]
      %v85 = vld [vmem:[#allocation6 + $0x28] sm:$0xff]
      %v86 = vld [vmem:[#allocation6 + $0x30] sm:$0xff]
      %v87 = vld [vmem:[#allocation6 + $0x38] sm:$0xff]
      %v88 = vld [vmem:[#allocation6 + $0x40] sm:$0xff]
      %v89 = vld [vmem:[#allocation6 + $0x48] sm:$0xff]
      %v90 = vld [vmem:[#allocation6 + $0x50] sm:$0xff]
      %v91 = vld [vmem:[#allocation6 + $0x58] sm:$0xff]
      %v92 = vld [vmem:[#allocation6 + $0x60] sm:$0xff]
      %v93 = vld [vmem:[#allocation6 + $0x68] sm:$0xff]
      %v94 = vld [vmem:[#allocation6 + $0x70] sm:$0xff]
      %v95 = vld [vmem:[#allocation6 + $0x78] sm:$0xff]
      %v96 = vld [vmem:[#allocation6 + $0x80] sm:$0xff]
      %v97 = vld [vmem:[#allocation6 + $0x88] sm:$0xff]
      %v98 = vld [vmem:[#allocation6 + $0x90] sm:$0xff]
      %v99 = vld [vmem:[#allocation6 + $0x98] sm:$0xff]
      %v100 = vld [vmem:[#allocation6 + $0xa0] sm:$0xff]
      %v101 = vld [vmem:[#allocation6 + $0xa8] sm:$0xff]
      %v102 = vld [vmem:[#allocation6 + $0xb0] sm:$0xff]
      %v103 = vld [vmem:[#allocation6 + $0xb8] sm:$0xff]
      %v104 = vld [vmem:[#allocation6 + $0xc0] sm:$0xff]
      %v105 = vld [vmem:[#allocation6 + $0xc8] sm:$0xff]
      %v106 = vld [vmem:[#allocation6 + $0xd0] sm:$0xff]
      %v107 = vld [vmem:[#allocation6 + $0xd8] sm:$0xff]
      %v108 = vld [vmem:[#allocation6 + $0xe0] sm:$0xff]
      %v109 = vld [vmem:[#allocation6 + $0xe8] sm:$0xff]
      %v110 = vld [vmem:[#allocation6 + $0xf0] sm:$0xff]
      %v111 = vld [vmem:[#allocation6 + $0xf8] sm:$0xff]
      %112 = vmatprep.subr.mxu0 0.0
      %113 = vmatpush1.msra.mxu0 %v80
      %114 = vmatprep.subr.mxu0 0.0
      %115 = vmatpush1.msra.mxu0 %v81
      %116 = vmatprep.subr.mxu0 0.0
      %117 = vmatpush1.msra.mxu0 %v82
      %118 = vmatprep.subr.mxu0 0.0
      %119 = vmatpush1.msra.mxu0 %v83
      %120 = vmatprep.subr.mxu0 0.0
      %121 = vmatpush1.msra.mxu0 %v84
      %122 = vmatprep.subr.mxu0 0.0
      %123 = vmatpush1.msra.mxu0 %v85
      %124 = vmatprep.subr.mxu0 0.0
      %125 = vmatpush1.msra.mxu0 %v86
      %126 = vmatprep.subr.mxu0 0.0
      %127 = vmatpush1.msra.mxu0 %v87
      %128 = vmatprep.subr.mxu0 0.0
      %129 = vmatpush1.msra.mxu0 %v88
      %130 = vmatprep.subr.mxu0 0.0
      %131 = vmatpush1.msra.mxu0 %v89
      %132 = vmatprep.subr.mxu0 0.0
      %133 = vmatpush1.msra.mxu0 %v90
      %134 = vmatprep.subr.mxu0 0.0
      %135 = vmatpush1.msra.mxu0 %v91
      %136 = vmatprep.subr.mxu0 0.0
      %137 = vmatpush1.msra.mxu0 %v92
      %138 = vmatprep.subr.mxu0 0.0
      %139 = vmatpush1.msra.mxu0 %v93
      %140 = vmatprep.subr.mxu0 0.0
      %141 = vmatpush1.msra.mxu0 %v94
      %142 = vmatprep.subr.mxu0 0.0
      %143 = vmatpush1.msra.mxu0 %v95
      %144 = vmatprep.subr.mxu0 0.0
      %145 = vmatpush1.msra.mxu0 %v96
      %146 = vmatprep.subr.mxu0 0.0
      %147 = vmatpush1.msra.mxu0 %v97
      %148 = vmatprep.subr.mxu0 0.0
      %149 = vmatpush1.msra.mxu0 %v98
      %150 = vmatprep.subr.mxu0 0.0
      %151 = vmatpush1.msra.mxu0 %v99
      %152 = vmatprep.subr.mxu0 0.0
      %153 = vmatpush1.msra.mxu0 %v100
      %154 = vmatprep.subr.mxu0 0.0
      %155 = vmatpush1.msra.mxu0 %v101
      %156 = vmatprep.subr.mxu0 0.0
      %157 = vmatpush1.msra.mxu0 %v102
      %158 = vmatprep.subr.mxu0 0.0
      %159 = vmatpush1.msra.mxu0 %v103
      %160 = vmatprep.subr.mxu0 0.0
      %161 = vmatpush1.msra.mxu0 %v104
      %162 = vmatprep.subr.mxu0 0.0
      %163 = vmatpush1.msra.mxu0 %v105
      %164 = vmatprep.subr.mxu0 0.0
      %165 = vmatpush1.msra.mxu0 %v106
      %166 = vmatprep.subr.mxu0 0.0
      %167 = vmatpush1.msra.mxu0 %v107
      %168 = vmatprep.subr.mxu0 0.0
      %169 = vmatpush1.msra.mxu0 %v108
      %170 = vmatprep.subr.mxu0 0.0
      %171 = vmatpush1.msra.mxu0 %v109
      %172 = vmatprep.subr.mxu0 0.0
      %173 = vmatpush1.msra.mxu0 %v110
      %174 = vmatprep.subr.mxu0 0.0
      %175 = vmatpush1.msra.mxu0 %v111
      %176 = vmatprep.mubr.f32.mxu0 %v79
      %177 = vmatmul.mubr.f32.gmra.mrb[0].mxu0 %v78
      %v178 = vpop.f32.mrb[0].mxu0
      %v179 = vadd.f32 0.0, %v178
      %v180 = vpop.f32.mrb[0].mxu0
      %181 = vdwg.mxu0
      %v182 = vld [vmem:[#allocation8] sm:$0xff]
      %v183 = vld [vmem:[#allocation8 + $0x8] sm:$0xff]
      %v184 = vld [vmem:[#allocation8 + $0x10] sm:$0xff]
      %v185 = vld [vmem:[#allocation8 + $0x18] sm:$0xff]
      %v186 = vld [vmem:[#allocation8 + $0x20] sm:$0xff]
      %v187 = vld [vmem:[#allocation8 + $0x28] sm:$0xff]
      %v188 = vld [vmem:[#allocation8 + $0x30] sm:$0xff]
      %v189 = vld [vmem:[#allocation8 + $0x38] sm:$0xff]
      %v190 = vld [vmem:[#allocation8 + $0x40] sm:$0xff]
      %v191 = vld [vmem:[#allocation8 + $0x48] sm:$0xff]
      %v192 = vld [vmem:[#allocation8 + $0x50] sm:$0xff]
      %v193 = vld [vmem:[#allocation8 + $0x58] sm:$0xff]
      %v194 = vld [vmem:[#allocation8 + $0x60] sm:$0xff]
      %v195 = vld [vmem:[#allocation8 + $0x68] sm:$0xff]
      %v196 = vld [vmem:[#allocation8 + $0x70] sm:$0xff]
      %v197 = vld [vmem:[#allocation8 + $0x78] sm:$0xff]
      %v198 = vld [vmem:[%s3] sm:$0x1]
      %v200 = vlaneseq
      %v201 = vshrl.u32 %v200, 7
      %v202 = vsub.s32 0, %v201
      %v203 = vrot.slane %v198, %v202
      %205 = vmatprep.subr.mxu0 0.0
      %206 = vmatpush1.msra.mxu0 %v182
      %207 = vmatprep.subr.mxu0 0.0
      %208 = vmatpush1.msra.mxu0 %v183
      %209 = vmatprep.subr.mxu0 0.0
      %210 = vmatpush1.msra.mxu0 %v184
      %211 = vmatprep.subr.mxu0 0.0
      %212 = vmatpush1.msra.mxu0 %v185
      %213 = vmatprep.subr.mxu0 0.0
      %214 = vmatpush1.msra.mxu0 %v186
      %215 = vmatprep.subr.mxu0 0.0
      %216 = vmatpush1.msra.mxu0 %v187
      %217 = vmatprep.subr.mxu0 0.0
      %218 = vmatpush1.msra.mxu0 %v188
      %219 = vmatprep.subr.mxu0 0.0
      %220 = vmatpush1.msra.mxu0 %v189
      %221 = vmatprep.subr.mxu0 0.0
      %222 = vmatpush1.msra.mxu0 %v190
      %223 = vmatprep.subr.mxu0 0.0
      %224 = vmatpush1.msra.mxu0 %v191
      %225 = vmatprep.subr.mxu0 0.0
      %226 = vmatpush1.msra.mxu0 %v192
      %227 = vmatprep.subr.mxu0 0.0
      %228 = vmatpush1.msra.mxu0 %v193
      %229 = vmatprep.subr.mxu0 0.0
      %230 = vmatpush1.msra.mxu0 %v194
      %231 = vmatprep.subr.mxu0 0.0
      %232 = vmatpush1.msra.mxu0 %v195
      %233 = vmatprep.subr.mxu0 0.0
      %234 = vmatpush1.msra.mxu0 %v196
      %235 = vmatprep.subr.mxu0 0.0
      %236 = vmatpush1.msra.mxu0 %v197
      %237 = vmatprep.subr.mxu0 0.0
      %238 = vmatpush1.msra.mxu0 0.0
      %239 = vmatprep.subr.mxu0 0.0
      %240 = vmatpush1.msra.mxu0 0.0
      %241 = vmatprep.subr.mxu0 0.0
      %242 = vmatpush1.msra.mxu0 0.0
      %243 = vmatprep.subr.mxu0 0.0
      %244 = vmatpush1.msra.mxu0 0.0
      %245 = vmatprep.subr.mxu0 0.0
      %246 = vmatpush1.msra.mxu0 0.0
      %247 = vmatprep.subr.mxu0 0.0
      %248 = vmatpush1.msra.mxu0 0.0
      %249 = vmatprep.subr.mxu0 0.0
      %250 = vmatpush1.msra.mxu0 0.0
      %251 = vmatprep.subr.mxu0 0.0
      %252 = vmatpush1.msra.mxu0 0.0
      %253 = vmatprep.subr.mxu0 0.0
      %254 = vmatpush1.msra.mxu0 0.0
      %255 = vmatprep.subr.mxu0 0.0
      %256 = vmatpush1.msra.mxu0 0.0
      %257 = vmatprep.subr.mxu0 0.0
      %258 = vmatpush1.msra.mxu0 0.0
      %259 = vmatprep.subr.mxu0 0.0
      %260 = vmatpush1.msra.mxu0 0.0
      %261 = vmatprep.subr.mxu0 0.0
      %262 = vmatpush1.msra.mxu0 0.0
      %263 = vmatprep.subr.mxu0 0.0
      %264 = vmatpush1.msra.mxu0 0.0
      %265 = vmatprep.subr.mxu0 0.0
      %266 = vmatpush1.msra.mxu0 0.0
      %267 = vmatprep.subr.mxu0 0.0
      %268 = vmatpush1.msra.mxu0 0.0
      %269 = vmatprep.mubr.f32.mxu0 0.0
      %270 = vmatmul.mubr.f32.gmra.mrb[0].mxu0 %v179
      %v271 = vpop.f32.mrb[0].mxu0
      %v272 = vadd.f32 %v203, %v271
      %v273 = vpop.f32.mrb[0].mxu0
      %274 = vdwg.mxu0
      %275 = vst [vmem:[#allocation9] sm:$0xff] %v179
      %276 = vst [vmem:[#allocation10] sm:$0xff] %v272
    $region37: #{tpu_custom_call.1} parent=1 // pred_fallthru
      _
    // Predicated region
    $region38: #{tpu_custom_call.1} parent=1 // pred_check
      _
    $region39: #{tpu_custom_call.1} parent=1 // pred_check_branch
      %278 = sbr.rel (0) target = $region41
    $region40: #{tpu_custom_call.1} parent=1 // pred_region
      %s280 = ssub.s32 128, 128
      %281 = vsyncadd [#allocation5], %s280
      %s283 = sshll.u32 [#allocation9], 4
      %s284 = int_to_ptr.vmem [resolvable:$true] %s283
      %286 = dma.vmem_to_hbm [thread:$0]  %s284, 128, %s4, [#allocation5]
    $region41: #{tpu_custom_call.1} parent=1 // pred_fallthru
      _
    // Predicated region
    $region42: #{tpu_custom_call.1} parent=1 // pred_check
      _
    $region43: #{tpu_custom_call.1} parent=1 // pred_check_branch
      %288 = sbr.rel (0) target = $region45
    $region44: #{tpu_custom_call.1} parent=1 // pred_region
      %s290 = ssub.s32 128, 128
      %291 = vsyncadd [#allocation11], %s290
      %s293 = sshll.u32 [#allocation10], 4
      %s294 = int_to_ptr.vmem [resolvable:$true] %s293
      %296 = dma.vmem_to_hbm [thread:$0]  %s294, 128, %s5, [#allocation11]
    $region45: #{tpu_custom_call.1} parent=1 // pred_fallthru
      _
    // Predicated region
    $region46: #{tpu_custom_call.1} parent=1 // pred_check
      _
    $region47: #{tpu_custom_call.1} parent=1 // pred_check_branch
      %298 = sbr.rel (0) target = $region49
    $region48: #{tpu_custom_call.1} parent=1 // pred_region
      %299 = dma.done [#allocation5], 128
    $region49: #{tpu_custom_call.1} parent=1 // pred_fallthru
      _
    // Predicated region
    $region50: #{tpu_custom_call.1} parent=1 // pred_check
      _
    $region51: #{tpu_custom_call.1} parent=1 // pred_check_branch
      %301 = sbr.rel (0) target = $region53
    $region52: #{tpu_custom_call.1} parent=1 // pred_region
      %302 = dma.done [#allocation11], 128
    $region53: #{tpu_custom_call.1} parent=1 // pred_fallthru
      _
    %303 = vsyncpa [#allocation4], 1
    %304 = vsyncpa [#allocation7], 1
    %305 = vsyncpa [#allocation5], 1
    %306 = vsyncpa [#allocation11], 1

</llo_original>
